<compile_context>
chip_gen: v7x
topology: tpu7x:2x2x1
jax: 0.10.0
libtpu: 0.0.40
codegen_flags: <defaults>
</compile_context>

<pallas_src>
import jax
import jax.numpy as jnp
from jax.experimental import pallas as pl
from jax.experimental.pallas import tpu as pltpu

SUBLANE = 8
MAX_TM = 4096  # cap on batch-tile rows; a few MB of VMEM at worst


def _leaky_relu(x, slope=0.2):
    return jnp.where(x > 0, x, slope * x)


def _round_up(x, m):
    return ((x + m - 1) // m) * m


def _choose_tm(batch_p):
    """Pick the batch-tile size (rows per grid step). batch_p is a multiple of 8."""
    if batch_p <= 1024:
        # Small batch: one step. Splitting would drop below ~512 rows/step,
        # where per-step overhead dominates.
        return batch_p
    # Mid/large batch: ensure >= 2 grid steps (megacore sharding on v7x),
    # capped so each step's tile stays modest in VMEM.
    half = _round_up(pl.cdiv(batch_p, 2), SUBLANE)
    return min(half, MAX_TM)


def generator_kernel(x_ref, w1_ref, b1_ref, w2_ref, b2_ref, w3_ref, b3_ref, o_ref):
    # One (tm, in_size) batch tile per grid step; all weights resident in VMEM
    # (constant index_maps -> no re-DMA across grid steps).
    x = x_ref[...]

    h = jnp.dot(x, w1_ref[...], preferred_element_type=jnp.float32) + b1_ref[...]
    h = _leaky_relu(h)

    h = jnp.dot(h, w2_ref[...], preferred_element_type=jnp.float32) + b2_ref[...]
    h = _leaky_relu(h)

    h = jnp.dot(h, w3_ref[...], preferred_element_type=jnp.float32) + b3_ref[...]
    o_ref[...] = _leaky_relu(h).astype(o_ref.dtype)


@jax.jit
def generator_forward(x, params):
    """x: [batch, input_size] float32. params: (w1,b1,w2,b2,w3,b3) with weights
    stored [in, out] and biases [1, out]. Returns [batch, output_size] float32."""
    w1, b1, w2, b2, w3, b3 = params
    batch, in_size = x.shape
    hidden = w1.shape[1]
    out_size = w3.shape[1]

    # Sublane-pad the batch only (cheap: at most 7 zero rows).
    batch_p = _round_up(batch, SUBLANE)
    if batch_p != batch:
        x = jnp.pad(x, ((0, batch_p - batch), (0, 0)))

    tm = _choose_tm(batch_p)
    grid = (pl.cdiv(batch_p, tm),)

    const = lambda i: (0, 0)  # weights/biases: same block every step -> resident

    out = pl.pallas_call(
        generator_kernel,
        out_shape=jax.ShapeDtypeStruct((batch_p, out_size), jnp.float32),
        grid_spec=pltpu.PrefetchScalarGridSpec(
            num_scalar_prefetch=0,
            grid=grid,
            in_specs=[
                pl.BlockSpec((tm, in_size), lambda i: (i, 0)),  # x tile (full feat dim)
                pl.BlockSpec((in_size, hidden), const),          # w1
                pl.BlockSpec((1, hidden), const),                # b1
                pl.BlockSpec((hidden, hidden), const),           # w2
                pl.BlockSpec((1, hidden), const),                # b2
                pl.BlockSpec((hidden, out_size), const),         # w3
                pl.BlockSpec((1, out_size), const),              # b3
            ],
            out_specs=pl.BlockSpec((tm, out_size), lambda i: (i, 0)),
        ),
        compiler_params=pltpu.CompilerParams(
            dimension_semantics=("parallel",),  # batch axis shards across TCs (v7x)
        ),
    )(x, w1, b1, w2, b2, w3, b3)

    if batch_p != batch:
        out = out[:batch]
    return out


def init_params(key, input_size=10, output_size=2, hidden_size=128):
    """Kaiming-normal weights (fan_in, gain=sqrt(2), matching the PyTorch module),
    zero biases. Weights stored [in, out]; biases [1, out]."""
    k1, k2, k3 = jax.random.split(key, 3)

    def kaiming(k, fan_in, fan_out):
        std = jnp.sqrt(2.0 / fan_in)
        return std * jax.random.normal(k, (fan_in, fan_out), dtype=jnp.float32)

    w1 = kaiming(k1, input_size, hidden_size)
    b1 = jnp.zeros((1, hidden_size), dtype=jnp.float32)
    w2 = kaiming(k2, hidden_size, hidden_size)
    b2 = jnp.zeros((1, hidden_size), dtype=jnp.float32)
    w3 = kaiming(k3, hidden_size, output_size)
    b3 = jnp.zeros((1, output_size), dtype=jnp.float32)
    return (w1, b1, w2, b2, w3, b3)


def reference_forward(x, params):
    w1, b1, w2, b2, w3, b3 = params
    h = _leaky_relu(x @ w1 + b1)
    h = _leaky_relu(h @ w2 + b2)
    return _leaky_relu(h @ w3 + b3)


if __name__ == "__main__":
    key = jax.random.PRNGKey(0)
    kx, kp = jax.random.split(key)

    input_size, output_size, hidden_size = 10, 2, 128
    batch = 8

    x = jax.random.normal(kx, (batch, input_size), dtype=jnp.float32)
    params = init_params(kp, input_size, output_size, hidden_size)

    out = generator_forward(x, params)
    out = jax.block_until_ready(out)

    ref = reference_forward(x, params)
    assert out.shape == (batch, output_size), out.shape
    assert jnp.allclose(out, ref, atol=1e-5, rtol=1e-5), "mismatch vs reference"

    print("KERNEL_OK")
</pallas_src>

<mosaic_0001>
module attributes {stable_mosaic.version = 11 : i64} {
  func.func @generator_kernel(%arg0: i32, %arg1: memref<8x10xf32, #tpu.memory_space<vmem>>, %arg2: memref<10x128xf32, #tpu.memory_space<vmem>>, %arg3: memref<1x128xf32, #tpu.memory_space<vmem>>, %arg4: memref<128x128xf32, #tpu.memory_space<vmem>>, %arg5: memref<1x128xf32, #tpu.memory_space<vmem>>, %arg6: memref<128x2xf32, #tpu.memory_space<vmem>>, %arg7: memref<1x2xf32, #tpu.memory_space<vmem>>, %arg8: memref<8x2xf32, #tpu.memory_space<vmem>>) attributes {dimension_semantics = [#tpu.dimension_semantics<parallel>], iteration_bounds = array<i64: 1>, scalar_prefetch = 0 : i64, scratch_operands = 0 : i64, tpu.core_type = #tpu.core_type<tc>, window_params = [{transform_indices = @transform_0, window_bounds = array<i64: 8, 10>}, {pipeline_mode = #tpu.pipeline_mode<synchronous>, transform_indices = @transform_1, window_bounds = array<i64: 10, 128>}, {pipeline_mode = #tpu.pipeline_mode<synchronous>, transform_indices = @transform_2, window_bounds = array<i64: 1, 128>}, {pipeline_mode = #tpu.pipeline_mode<synchronous>, transform_indices = @transform_3, window_bounds = array<i64: 128, 128>}, {pipeline_mode = #tpu.pipeline_mode<synchronous>, transform_indices = @transform_4, window_bounds = array<i64: 1, 128>}, {pipeline_mode = #tpu.pipeline_mode<synchronous>, transform_indices = @transform_5, window_bounds = array<i64: 128, 2>}, {pipeline_mode = #tpu.pipeline_mode<synchronous>, transform_indices = @transform_6, window_bounds = array<i64: 1, 2>}, {transform_indices = @transform_7, window_bounds = array<i64: 8, 2>}]} {
    %c0 = arith.constant 0 : index
    %c0_0 = arith.constant 0 : index
    %0 = vector.load %arg1[%c0, %c0_0] : memref<8x10xf32, #tpu.memory_space<vmem>>, vector<8x10xf32>
    %c0_1 = arith.constant 0 : index
    %c0_2 = arith.constant 0 : index
    %1 = vector.load %arg2[%c0_1, %c0_2] : memref<10x128xf32, #tpu.memory_space<vmem>>, vector<10x128xf32>
    %cst = arith.constant dense<0.000000e+00> : vector<8x128xf32>
    %2 = tpu.matmul %0, %1, %cst {dimension_numbers = #tpu.dot_dimension_numbers<[1], [0], [0], [1], [0, 0, 1, 1], [], []>} : vector<8x10xf32>, vector<10x128xf32>, vector<8x128xf32> -> vector<8x128xf32>
    %c0_3 = arith.constant 0 : index
    %c0_4 = arith.constant 0 : index
    %3 = vector.load %arg3[%c0_3, %c0_4] : memref<1x128xf32, #tpu.memory_space<vmem>>, vector<1x128xf32>
    %4 = vector.broadcast %3 : vector<1x128xf32> to vector<8x128xf32>
    %5 = arith.addf %2, %4 : vector<8x128xf32>
    %cst_5 = arith.constant 0.000000e+00 : f32
    %6 = vector.broadcast %cst_5 : f32 to vector<8x128xf32>
    %7 = arith.cmpf ogt, %5, %6 : vector<8x128xf32>
    %cst_6 = arith.constant 2.000000e-01 : f32
    %8 = vector.broadcast %cst_6 : f32 to vector<8x128xf32>
    %9 = arith.mulf %8, %5 : vector<8x128xf32>
    %10 = arith.select %7, %5, %9 : vector<8x128xi1>, vector<8x128xf32>
    %c0_7 = arith.constant 0 : index
    %c0_8 = arith.constant 0 : index
    %11 = vector.load %arg4[%c0_7, %c0_8] : memref<128x128xf32, #tpu.memory_space<vmem>>, vector<128x128xf32>
    %cst_9 = arith.constant dense<0.000000e+00> : vector<8x128xf32>
    %12 = tpu.matmul %10, %11, %cst_9 {dimension_numbers = #tpu.dot_dimension_numbers<[1], [0], [0], [1], [0, 0, 1, 1], [], []>} : vector<8x128xf32>, vector<128x128xf32>, vector<8x128xf32> -> vector<8x128xf32>
    %c0_10 = arith.constant 0 : index
    %c0_11 = arith.constant 0 : index
    %13 = vector.load %arg5[%c0_10, %c0_11] : memref<1x128xf32, #tpu.memory_space<vmem>>, vector<1x128xf32>
    %14 = vector.broadcast %13 : vector<1x128xf32> to vector<8x128xf32>
    %15 = arith.addf %12, %14 : vector<8x128xf32>
    %cst_12 = arith.constant 0.000000e+00 : f32
    %16 = vector.broadcast %cst_12 : f32 to vector<8x128xf32>
    %17 = arith.cmpf ogt, %15, %16 : vector<8x128xf32>
    %cst_13 = arith.constant 2.000000e-01 : f32
    %18 = vector.broadcast %cst_13 : f32 to vector<8x128xf32>
    %19 = arith.mulf %18, %15 : vector<8x128xf32>
    %20 = arith.select %17, %15, %19 : vector<8x128xi1>, vector<8x128xf32>
    %c0_14 = arith.constant 0 : index
    %c0_15 = arith.constant 0 : index
    %21 = vector.load %arg6[%c0_14, %c0_15] : memref<128x2xf32, #tpu.memory_space<vmem>>, vector<128x2xf32>
    %cst_16 = arith.constant dense<0.000000e+00> : vector<8x2xf32>
    %22 = tpu.matmul %20, %21, %cst_16 {dimension_numbers = #tpu.dot_dimension_numbers<[1], [0], [0], [1], [0, 0, 1, 1], [], []>} : vector<8x128xf32>, vector<128x2xf32>, vector<8x2xf32> -> vector<8x2xf32>
    %c0_17 = arith.constant 0 : index
    %c0_18 = arith.constant 0 : index
    %23 = vector.load %arg7[%c0_17, %c0_18] : memref<1x2xf32, #tpu.memory_space<vmem>>, vector<1x2xf32>
    %24 = vector.broadcast %23 : vector<1x2xf32> to vector<8x2xf32>
    %25 = arith.addf %22, %24 : vector<8x2xf32>
    %cst_19 = arith.constant 0.000000e+00 : f32
    %26 = vector.broadcast %cst_19 : f32 to vector<8x2xf32>
    %27 = arith.cmpf ogt, %25, %26 : vector<8x2xf32>
    %cst_20 = arith.constant 2.000000e-01 : f32
    %28 = vector.broadcast %cst_20 : f32 to vector<8x2xf32>
    %29 = arith.mulf %28, %25 : vector<8x2xf32>
    %30 = arith.select %27, %25, %29 : vector<8x2xi1>, vector<8x2xf32>
    %c0_21 = arith.constant 0 : index
    %c0_22 = arith.constant 0 : index
    %31 = vector.load %arg8[%c0_21, %c0_22] : memref<8x2xf32, #tpu.memory_space<vmem>>, vector<8x2xf32>
    tpu.vector_store %arg8[%c0_21, %c0_22], %30 {strides = array<i32>} : memref<8x2xf32, #tpu.memory_space<vmem>>, vector<8x2xf32>,
    return
  }
  func.func @transform_0(%arg0: i32) -> (i32, i32) {
    %c0_i32 = arith.constant 0 : i32
    %c0_i32_0 = arith.constant 0 : i32
    return %arg0, %c0_i32 : i32, i32
  }
  func.func @transform_1(%arg0: i32) -> (i32, i32) {
    %c0_i32 = arith.constant 0 : i32
    %c0_i32_0 = arith.constant 0 : i32
    %c0_i32_1 = arith.constant 0 : i32
    return %c0_i32, %c0_i32_0 : i32, i32
  }
  func.func @transform_2(%arg0: i32) -> (i32, i32) {
    %c0_i32 = arith.constant 0 : i32
    %c0_i32_0 = arith.constant 0 : i32
    %c0_i32_1 = arith.constant 0 : i32
    return %c0_i32, %c0_i32_0 : i32, i32
  }
  func.func @transform_3(%arg0: i32) -> (i32, i32) {
    %c0_i32 = arith.constant 0 : i32
    %c0_i32_0 = arith.constant 0 : i32
    %c0_i32_1 = arith.constant 0 : i32
    return %c0_i32, %c0_i32_0 : i32, i32
  }
  func.func @transform_4(%arg0: i32) -> (i32, i32) {
    %c0_i32 = arith.constant 0 : i32
    %c0_i32_0 = arith.constant 0 : i32
    %c0_i32_1 = arith.constant 0 : i32
    return %c0_i32, %c0_i32_0 : i32, i32
  }
  func.func @transform_5(%arg0: i32) -> (i32, i32) {
    %c0_i32 = arith.constant 0 : i32
    %c0_i32_0 = arith.constant 0 : i32
    %c0_i32_1 = arith.constant 0 : i32
    return %c0_i32, %c0_i32_0 : i32, i32
  }
  func.func @transform_6(%arg0: i32) -> (i32, i32) {
    %c0_i32 = arith.constant 0 : i32
    %c0_i32_0 = arith.constant 0 : i32
    %c0_i32_1 = arith.constant 0 : i32
    return %c0_i32, %c0_i32_0 : i32, i32
  }
  func.func @transform_7(%arg0: i32) -> (i32, i32) {
    %c0_i32 = arith.constant 0 : i32
    %c0_i32_0 = arith.constant 0 : i32
    return %arg0, %c0_i32 : i32, i32
  }
}

</mosaic_0001>

<llo_original>
// kernel: generator_forward.1
$region0: #{generator_forward.1}
  #allocation0 [shape = 'u32[]', space=smem, size = 0x4, offset = 0x4, fixed_abs, tag = 'smem constant byte address 0x4 - core index']
  #allocation1 [shape = 'u32[144,128]{1,0:T(1,128)}', space=vmem, size = 0x12000, scoped, tag = 'internal scratch']
  %s0 = inlined_call_operand.vmem [shape: f32[8,10], index: 0, kind: input, shape index: {}]
  %s1 = inlined_call_operand.hbm [shape: f32[10,128], index: 1, kind: input, shape index: {}]
  %s2 = inlined_call_operand.vmem [shape: f32[1,128], index: 2, kind: input, shape index: {}]
  %s3 = inlined_call_operand.vmem [shape: f32[128,128], index: 3, kind: input, shape index: {}]
  %s4 = inlined_call_operand.vmem [shape: f32[1,128], index: 4, kind: input, shape index: {}]
  %s5 = inlined_call_operand.vmem [shape: f32[128,2], index: 5, kind: input, shape index: {}]
  %s6 = inlined_call_operand.vmem [shape: f32[1,2], index: 6, kind: input, shape index: {}]
  %s7 = inlined_call_operand.vmem [shape: f32[8,2], index: 7, kind: output, shape index: {}]
  %s8 = sld [smem:[#allocation0]]
  $region42: #{generator_forward.1} parent=0
    _
  %s10 = ssub.s32 1, %s8
  %s11 = scalar_select 0, %s10, %s8
  $region1: #{generator_forward.1} parent=0
    #allocation2 [shape = 'u8[8192]{0}', space=vmem, size = 0x2000, scoped, tag = 'input window, operand 1, single buffered']
    #allocation3 [shape = 's32[1]{0}', space=sflag, size = 0x4, scoped, tag = 'scoped memory for generator_forward.1']
    %12 = vsyncpa [#allocation3], 0
    // Predicated region
    $region2: #{generator_forward.1} parent=1 // pred_check
      _
    $region3: #{generator_forward.1} parent=1 // pred_check_branch
      %14 = sbr.rel (0) target = $region5
    $region4: #{generator_forward.1} parent=1 // pred_region
      _
    $region5: #{generator_forward.1} parent=1 // pred_fallthru
      _
    // Predicated region
    $region6: #{generator_forward.1} parent=1 // pred_check
      _
    $region7: #{generator_forward.1} parent=1 // pred_check_branch
      %16 = sbr.rel (0) target = $region9
    $region8: #{generator_forward.1} parent=1 // pred_region
      %s18 = ssub.s32 256, 256
      %19 = vsyncadd [#allocation3], %s18
      %s20 = sshll.u32 [#allocation2], 4
      %s21 = int_to_ptr.vmem [resolvable:$true] %s20
      %26 = dma.hbm_to_vmem [thread:$0]  %s1, 256, %s21, [#allocation3], 128, 128, 8
    $region9: #{generator_forward.1} parent=1 // pred_fallthru
      _
    // Predicated region
    $region10: #{generator_forward.1} parent=1 // pred_check
      _
    $region11: #{generator_forward.1} parent=1 // pred_check_branch
      %28 = sbr.rel (0) target = $region13
    $region12: #{generator_forward.1} parent=1 // pred_region
      _
    $region13: #{generator_forward.1} parent=1 // pred_fallthru
      _
    // Predicated region
    $region14: #{generator_forward.1} parent=1 // pred_check
      _
    $region15: #{generator_forward.1} parent=1 // pred_check_branch
      %30 = sbr.rel (0) target = $region17
    $region16: #{generator_forward.1} parent=1 // pred_region
      _
    $region17: #{generator_forward.1} parent=1 // pred_fallthru
      _
    // Predicated region
    $region18: #{generator_forward.1} parent=1 // pred_check
      _
    $region19: #{generator_forward.1} parent=1 // pred_check_branch
      %32 = sbr.rel (0) target = $region21
    $region20: #{generator_forward.1} parent=1 // pred_region
      _
    $region21: #{generator_forward.1} parent=1 // pred_fallthru
      _
    // Predicated region
    $region22: #{generator_forward.1} parent=1 // pred_check
      _
    $region23: #{generator_forward.1} parent=1 // pred_check_branch
      %34 = sbr.rel (0) target = $region25
    $region24: #{generator_forward.1} parent=1 // pred_region
      _
    $region25: #{generator_forward.1} parent=1 // pred_fallthru
      _
    // Predicated region
    $region26: #{generator_forward.1} parent=1 // pred_check
      _
    $region27: #{generator_forward.1} parent=1 // pred_check_branch
      %36 = sbr.rel (0) target = $region29
    $region28: #{generator_forward.1} parent=1 // pred_region
      _
    $region29: #{generator_forward.1} parent=1 // pred_fallthru
      _
    // Predicated region
    $region30: #{generator_forward.1} parent=1 // pred_check
      _
    $region31: #{generator_forward.1} parent=1 // pred_check_branch
      %38 = sbr.rel (0) target = $region33
    $region32: #{generator_forward.1} parent=1 // pred_region
      %39 = dma.done [#allocation3], 256
    $region33: #{generator_forward.1} parent=1 // pred_fallthru
      _
    %v40 = vld [vmem:[%s0] sm:$0xff]
    %v41 = vld [vmem:[#allocation2] sm:$0xff]
    %v42 = vld [vmem:[#allocation2 + $0x8] sm:$0x3]
    %v43 = vld [vmem:[%s2] sm:$0x1]
    %v45 = vlaneseq
    %v46 = vshrl.u32 %v45, 7
    %v47 = vsub.s32 0, %v46
    %v48 = vrot.slane %v43, %v47
    %vm50 = vcmask 80896
    %v52 = vsel %vm50, %v40, 0
    %vm54 = vcmask 1041408
    %v56 = vsel %vm54, %v42, 0
    %58 = vmatprep.subr.mxu0 0.0
    %59 = vmatpush1.msra.mxu0 %v41
    %60 = vmatprep.subr.mxu0 0.0
    %61 = vmatpush1.msra.mxu0 %v56
    %62 = vmatprep.subr.mxu0 0.0
    %63 = vmatpush1.msra.mxu0 0.0
    %64 = vmatprep.subr.mxu0 0.0
    %65 = vmatpush1.msra.mxu0 0.0
    %66 = vmatprep.subr.mxu0 0.0
    %67 = vmatpush1.msra.mxu0 0.0
    %68 = vmatprep.subr.mxu0 0.0
    %69 = vmatpush1.msra.mxu0 0.0
    %70 = vmatprep.subr.mxu0 0.0
    %71 = vmatpush1.msra.mxu0 0.0
    %72 = vmatprep.subr.mxu0 0.0
    %73 = vmatpush1.msra.mxu0 0.0
    %74 = vmatprep.subr.mxu0 0.0
    %75 = vmatpush1.msra.mxu0 0.0
    %76 = vmatprep.subr.mxu0 0.0
    %77 = vmatpush1.msra.mxu0 0.0
    %78 = vmatprep.subr.mxu0 0.0
    %79 = vmatpush1.msra.mxu0 0.0
    %80 = vmatprep.subr.mxu0 0.0
    %81 = vmatpush1.msra.mxu0 0.0
    %82 = vmatprep.subr.mxu0 0.0
    %83 = vmatpush1.msra.mxu0 0.0
    %84 = vmatprep.subr.mxu0 0.0
    %85 = vmatpush1.msra.mxu0 0.0
    %86 = vmatprep.subr.mxu0 0.0
    %87 = vmatpush1.msra.mxu0 0.0
    %88 = vmatprep.subr.mxu0 0.0
    %89 = vmatpush1.msra.mxu0 0.0
    %90 = vmatprep.subr.mxu0 0.0
    %91 = vmatpush1.msra.mxu0 0.0
    %92 = vmatprep.subr.mxu0 0.0
    %93 = vmatpush1.msra.mxu0 0.0
    %94 = vmatprep.subr.mxu0 0.0
    %95 = vmatpush1.msra.mxu0 0.0
    %96 = vmatprep.subr.mxu0 0.0
    %97 = vmatpush1.msra.mxu0 0.0
    %98 = vmatprep.subr.mxu0 0.0
    %99 = vmatpush1.msra.mxu0 0.0
    %100 = vmatprep.subr.mxu0 0.0
    %101 = vmatpush1.msra.mxu0 0.0
    %102 = vmatprep.subr.mxu0 0.0
    %103 = vmatpush1.msra.mxu0 0.0
    %104 = vmatprep.subr.mxu0 0.0
    %105 = vmatpush1.msra.mxu0 0.0
    %106 = vmatprep.subr.mxu0 0.0
    %107 = vmatpush1.msra.mxu0 0.0
    %108 = vmatprep.subr.mxu0 0.0
    %109 = vmatpush1.msra.mxu0 0.0
    %110 = vmatprep.subr.mxu0 0.0
    %111 = vmatpush1.msra.mxu0 0.0
    %112 = vmatprep.subr.mxu0 0.0
    %113 = vmatpush1.msra.mxu0 0.0
    %114 = vmatprep.subr.mxu0 0.0
    %115 = vmatpush1.msra.mxu0 0.0
    %116 = vmatprep.subr.mxu0 0.0
    %117 = vmatpush1.msra.mxu0 0.0
    %118 = vmatprep.subr.mxu0 0.0
    %119 = vmatpush1.msra.mxu0 0.0
    %120 = vmatprep.subr.mxu0 0.0
    %121 = vmatpush1.msra.mxu0 0.0
    %122 = vmatprep.mubr.f32.mxu0 0.0
    %123 = vmatmul.mubr.f32.gmra.mrb[0].mxu0 %v52
    %v124 = vpop.f32.mrb[0].mxu0
    %v125 = vadd.f32 %v48, %v124
    %v126 = vpop.f32.mrb[0].mxu0
    %127 = vdwg.mxu0
    %vm128 = vcmp.gt.f32.partialorder %v125, 0.0
    %v129 = vmul.f32 %v125, 0.2
    %v130 = vsel %vm128, %v125, %v129
    %v131 = vld [vmem:[%s3] sm:$0xff]
    %v132 = vld [vmem:[%s3 + $0x8] sm:$0xff]
    %v133 = vld [vmem:[%s3 + $0x10] sm:$0xff]
    %v134 = vld [vmem:[%s3 + $0x18] sm:$0xff]
    %v135 = vld [vmem:[%s3 + $0x20] sm:$0xff]
    %v136 = vld [vmem:[%s3 + $0x28] sm:$0xff]
    %v137 = vld [vmem:[%s3 + $0x30] sm:$0xff]
    %v138 = vld [vmem:[%s3 + $0x38] sm:$0xff]
    %v139 = vld [vmem:[%s3 + $0x40] sm:$0xff]
    %v140 = vld [vmem:[%s3 + $0x48] sm:$0xff]
    %v141 = vld [vmem:[%s3 + $0x50] sm:$0xff]
    %v142 = vld [vmem:[%s3 + $0x58] sm:$0xff]
    %v143 = vld [vmem:[%s3 + $0x60] sm:$0xff]
    %v144 = vld [vmem:[%s3 + $0x68] sm:$0xff]
    %v145 = vld [vmem:[%s3 + $0x70] sm:$0xff]
    %v146 = vld [vmem:[%s3 + $0x78] sm:$0xff]
    %v147 = vld [vmem:[%s4] sm:$0x1]
    %v149 = vlaneseq
    %v150 = vshrl.u32 %v149, 7
    %v151 = vsub.s32 0, %v150
    %v152 = vrot.slane %v147, %v151
    %154 = vmatprep.subr.mxu0 0.0
    %155 = vmatpush1.msra.mxu0 %v131
    %156 = vmatprep.subr.mxu0 0.0
    %157 = vmatpush1.msra.mxu0 %v132
    %158 = vmatprep.subr.mxu0 0.0
    %159 = vmatpush1.msra.mxu0 %v133
    %160 = vmatprep.subr.mxu0 0.0
    %161 = vmatpush1.msra.mxu0 %v134
    %162 = vmatprep.subr.mxu0 0.0
    %163 = vmatpush1.msra.mxu0 %v135
    %164 = vmatprep.subr.mxu0 0.0
    %165 = vmatpush1.msra.mxu0 %v136
    %166 = vmatprep.subr.mxu0 0.0
    %167 = vmatpush1.msra.mxu0 %v137
    %168 = vmatprep.subr.mxu0 0.0
    %169 = vmatpush1.msra.mxu0 %v138
    %170 = vmatprep.subr.mxu0 0.0
    %171 = vmatpush1.msra.mxu0 %v139
    %172 = vmatprep.subr.mxu0 0.0
    %173 = vmatpush1.msra.mxu0 %v140
    %174 = vmatprep.subr.mxu0 0.0
    %175 = vmatpush1.msra.mxu0 %v141
    %176 = vmatprep.subr.mxu0 0.0
    %177 = vmatpush1.msra.mxu0 %v142
    %178 = vmatprep.subr.mxu0 0.0
    %179 = vmatpush1.msra.mxu0 %v143
    %180 = vmatprep.subr.mxu0 0.0
    %181 = vmatpush1.msra.mxu0 %v144
    %182 = vmatprep.subr.mxu0 0.0
    %183 = vmatpush1.msra.mxu0 %v145
    %184 = vmatprep.subr.mxu0 0.0
    %185 = vmatpush1.msra.mxu0 %v146
    %186 = vmatprep.subr.mxu0 0.0
    %187 = vmatpush1.msra.mxu0 0.0
    %188 = vmatprep.subr.mxu0 0.0
    %189 = vmatpush1.msra.mxu0 0.0
    %190 = vmatprep.subr.mxu0 0.0
    %191 = vmatpush1.msra.mxu0 0.0
    %192 = vmatprep.subr.mxu0 0.0
    %193 = vmatpush1.msra.mxu0 0.0
    %194 = vmatprep.subr.mxu0 0.0
    %195 = vmatpush1.msra.mxu0 0.0
    %196 = vmatprep.subr.mxu0 0.0
    %197 = vmatpush1.msra.mxu0 0.0
    %198 = vmatprep.subr.mxu0 0.0
    %199 = vmatpush1.msra.mxu0 0.0
    %200 = vmatprep.subr.mxu0 0.0
    %201 = vmatpush1.msra.mxu0 0.0
    %202 = vmatprep.subr.mxu0 0.0
    %203 = vmatpush1.msra.mxu0 0.0
    %204 = vmatprep.subr.mxu0 0.0
    %205 = vmatpush1.msra.mxu0 0.0
    %206 = vmatprep.subr.mxu0 0.0
    %207 = vmatpush1.msra.mxu0 0.0
    %208 = vmatprep.subr.mxu0 0.0
    %209 = vmatpush1.msra.mxu0 0.0
    %210 = vmatprep.subr.mxu0 0.0
    %211 = vmatpush1.msra.mxu0 0.0
    %212 = vmatprep.subr.mxu0 0.0
    %213 = vmatpush1.msra.mxu0 0.0
    %214 = vmatprep.subr.mxu0 0.0
    %215 = vmatpush1.msra.mxu0 0.0
    %216 = vmatprep.subr.mxu0 0.0
    %217 = vmatpush1.msra.mxu0 0.0
    %218 = vmatprep.mubr.f32.mxu0 0.0
    %219 = vmatmul.mubr.f32.gmra.mrb[0].mxu0 %v130
    %v220 = vpop.f32.mrb[0].mxu0
    %v221 = vadd.f32 %v152, %v220
    %v222 = vpop.f32.mrb[0].mxu0
    %223 = vdwg.mxu0
    %vm224 = vcmp.gt.f32.partialorder %v221, 0.0
    %v225 = vmul.f32 %v221, 0.2
    %v226 = vsel %vm224, %v221, %v225
    %v227 = vld [vmem:[%s5] sm:$0xff]
    %v228 = vld [vmem:[%s5 + $0x8] sm:$0xff]
    %v229 = vld [vmem:[%s5 + $0x10] sm:$0xff]
    %v230 = vld [vmem:[%s5 + $0x18] sm:$0xff]
    %v231 = vld [vmem:[%s5 + $0x20] sm:$0xff]
    %v232 = vld [vmem:[%s5 + $0x28] sm:$0xff]
    %v233 = vld [vmem:[%s5 + $0x30] sm:$0xff]
    %v234 = vld [vmem:[%s5 + $0x38] sm:$0xff]
    %v235 = vld [vmem:[%s5 + $0x40] sm:$0xff]
    %v236 = vld [vmem:[%s5 + $0x48] sm:$0xff]
    %v237 = vld [vmem:[%s5 + $0x50] sm:$0xff]
    %v238 = vld [vmem:[%s5 + $0x58] sm:$0xff]
    %v239 = vld [vmem:[%s5 + $0x60] sm:$0xff]
    %v240 = vld [vmem:[%s5 + $0x68] sm:$0xff]
    %v241 = vld [vmem:[%s5 + $0x70] sm:$0xff]
    %v242 = vld [vmem:[%s5 + $0x78] sm:$0xff]
    %v243 = vld [vmem:[%s6] sm:$0x1]
    %v245 = vlaneseq
    %v246 = vshrl.u32 %v245, 7
    %v247 = vsub.s32 0, %v246
    %v248 = vrot.slane %v243, %v247
    %250 = vmatprep.subr.mxu0 0.0
    %251 = vmatpush1.msra.mxu0 %v227
    %252 = vmatprep.subr.mxu0 0.0
    %253 = vmatpush1.msra.mxu0 %v228
    %254 = vmatprep.subr.mxu0 0.0
    %255 = vmatpush1.msra.mxu0 %v229
    %256 = vmatprep.subr.mxu0 0.0
    %257 = vmatpush1.msra.mxu0 %v230
    %258 = vmatprep.subr.mxu0 0.0
    %259 = vmatpush1.msra.mxu0 %v231
    %260 = vmatprep.subr.mxu0 0.0
    %261 = vmatpush1.msra.mxu0 %v232
    %262 = vmatprep.subr.mxu0 0.0
    %263 = vmatpush1.msra.mxu0 %v233
    %264 = vmatprep.subr.mxu0 0.0
    %265 = vmatpush1.msra.mxu0 %v234
    %266 = vmatprep.subr.mxu0 0.0
    %267 = vmatpush1.msra.mxu0 %v235
    %268 = vmatprep.subr.mxu0 0.0
    %269 = vmatpush1.msra.mxu0 %v236
    %270 = vmatprep.subr.mxu0 0.0
    %271 = vmatpush1.msra.mxu0 %v237
    %272 = vmatprep.subr.mxu0 0.0
    %273 = vmatpush1.msra.mxu0 %v238
    %274 = vmatprep.subr.mxu0 0.0
    %275 = vmatpush1.msra.mxu0 %v239
    %276 = vmatprep.subr.mxu0 0.0
    %277 = vmatpush1.msra.mxu0 %v240
    %278 = vmatprep.subr.mxu0 0.0
    %279 = vmatpush1.msra.mxu0 %v241
    %280 = vmatprep.subr.mxu0 0.0
    %281 = vmatpush1.msra.mxu0 %v242
    %282 = vmatprep.subr.mxu0 0.0
    %283 = vmatpush1.msra.mxu0 0.0
    %284 = vmatprep.subr.mxu0 0.0
    %285 = vmatpush1.msra.mxu0 0.0
    %286 = vmatprep.subr.mxu0 0.0
    %287 = vmatpush1.msra.mxu0 0.0
    %288 = vmatprep.subr.mxu0 0.0
    %289 = vmatpush1.msra.mxu0 0.0
    %290 = vmatprep.subr.mxu0 0.0
    %291 = vmatpush1.msra.mxu0 0.0
    %292 = vmatprep.subr.mxu0 0.0
    %293 = vmatpush1.msra.mxu0 0.0
    %294 = vmatprep.subr.mxu0 0.0
    %295 = vmatpush1.msra.mxu0 0.0
    %296 = vmatprep.subr.mxu0 0.0
    %297 = vmatpush1.msra.mxu0 0.0
    %298 = vmatprep.subr.mxu0 0.0
    %299 = vmatpush1.msra.mxu0 0.0
    %300 = vmatprep.subr.mxu0 0.0
    %301 = vmatpush1.msra.mxu0 0.0
    %302 = vmatprep.subr.mxu0 0.0
    %303 = vmatpush1.msra.mxu0 0.0
    %304 = vmatprep.subr.mxu0 0.0
    %305 = vmatpush1.msra.mxu0 0.0
    %306 = vmatprep.subr.mxu0 0.0
    %307 = vmatpush1.msra.mxu0 0.0
    %308 = vmatprep.subr.mxu0 0.0
    %309 = vmatpush1.msra.mxu0 0.0
    %310 = vmatprep.subr.mxu0 0.0
    %311 = vmatpush1.msra.mxu0 0.0
    %312 = vmatprep.subr.mxu0 0.0
    %313 = vmatpush1.msra.mxu0 0.0
    %314 = vmatprep.mubr.f32.mxu0 0.0
    %315 = vmatmul.mubr.f32.gmra.mrb[0].mxu0 %v226
    %v316 = vpop.f32.mrb[0].mxu0
    %v317 = vadd.f32 %v248, %v316
    %v318 = vpop.f32.mrb[0].mxu0
    %319 = vdwg.mxu0
    %vm320 = vcmp.gt.f32.partialorder %v317, 0.0
    %v321 = vmul.f32 %v317, 0.2
    %v322 = vsel %vm320, %v317, %v321
    %vm323 = vcmask 15360
    %324 = vst.msk [vmem:[%s7] sm:$0xff] %vm323, %v322
    // Predicated region
    $region34: #{generator_forward.1} parent=1 // pred_check
      _
    $region35: #{generator_forward.1} parent=1 // pred_check_branch
      %326 = sbr.rel (0) target = $region37
    $region36: #{generator_forward.1} parent=1 // pred_region
      _
    $region37: #{generator_forward.1} parent=1 // pred_fallthru
      _
    // Predicated region
    $region38: #{generator_forward.1} parent=1 // pred_check
      _
    $region39: #{generator_forward.1} parent=1 // pred_check_branch
      %328 = sbr.rel (0) target = $region41
    $region40: #{generator_forward.1} parent=1 // pred_region
      _
    $region41: #{generator_forward.1} parent=1 // pred_fallthru
      _
    %329 = vsyncpa [#allocation3], 1

</llo_original>
